<compile_context>
chip_gen: v5e
topology: v5e:2x2
jax: 0.10.0
libtpu: 0.0.40
codegen_flags: <defaults>
</compile_context>

<pallas_src>
import functools

import jax
import jax.numpy as jnp
from jax import lax
from jax.experimental import pallas as pl
from jax.experimental.pallas import tpu as pltpu

_LANE = 128
_TARGET_STEP_BYTES = 4 << 20      # aim for ~4 MiB of DMA per grid step
_MIN_SPLIT_BYTES = 1 << 20        # only force >=2 grid steps above this much work
_VPU_ACC_BYTES = 64 << 10         # keep the live f32 MAC accumulator ~vreg-sized


def _cdiv(a, b):
    return -(-a // b)


def _physical_vmem_bytes(default=64 << 20):
    """Physical VMEM per core (v7x: 64 MiB, v5e/v6e: 128 MiB); safe fallback."""
    try:
        info = pltpu.get_tpu_info()
        for name in ("vmem_capacity_bytes", "vmem_bytes", "vmem_size_bytes"):
            v = getattr(info, name, None)
            if v:
                return int(v)
    except Exception:
        pass
    return default


def _pick_tiles(B, S, bytes_per_col, budget, *, max_b_tile=None, max_s_tile=None):
    """Choose (b_tile, s_tile) so each grid step moves MBs of DMA within budget."""

    def step_bytes(bt, st):
        return 2 * bt * st * bytes_per_col          # double-buffered x + y tiles

    # Seq tile: toward the whole sequence, capped by the VMEM budget for one
    # batch row and by the per-step DMA target (batch blocking supplies the rest).
    s_cap = S if max_s_tile is None else max(1, min(S, int(max_s_tile)))
    s_fit = max(1, budget // (2 * bytes_per_col))
    s_want = max(16 * _LANE, _TARGET_STEP_BYTES // bytes_per_col)
    s_tile = min(s_cap, s_fit, s_want)
    if s_tile < S:                                  # partial seq blocks must be lane-tiled
        s_tile = (s_tile // _LANE) * _LANE
        if s_tile == 0:
            s_tile = S if S < _LANE else _LANE

    # Batch tile: grow (powers of two) to amortize the ~0.35 us per-step overhead.
    b_cap = B if max_b_tile is None else max(1, min(B, int(max_b_tile)))
    b_tile = 1
    while (b_tile * 2 <= b_cap
           and step_bytes(b_tile * 2, s_tile) <= budget
           and step_bytes(b_tile, s_tile) < _TARGET_STEP_BYTES):
        b_tile *= 2

    # Keep >= 2 grid steps when there is real work so both v7x TensorCores
    # get a share of this memory-bound kernel ("parallel" megacore sharding).
    if (_cdiv(B, b_tile) * _cdiv(S, s_tile) < 2
            and step_bytes(b_tile, s_tile) >= _MIN_SPLIT_BYTES):
        if b_tile > 1:
            b_tile = _cdiv(b_tile, 2)
        elif S >= 2 * _LANE:
            s_tile = max(_LANE, ((s_tile // 2) // _LANE) * _LANE)

    return b_tile, s_tile


def _pick_slab(s_tile, c_out):
    """Largest 128-multiple seq slab whose f32 accumulator stays ~vreg-sized."""
    for cand in (512, 256, 128):
        if s_tile > cand and c_out * cand * 4 <= _VPU_ACC_BYTES:
            return cand
    return s_tile


def _td_dense_kernel(x_ref, w_ref, b_ref, o_ref, *, use_vpu, s_slab):
    # x_ref: (b_tile, C_in, s_tile)   w_ref: (C_out, C_in)   b_ref: (C_out, 1)
    # o_ref: (b_tile, C_out, s_tile)
    b_tile, c_in, s_tile = x_ref.shape
    w = w_ref[...]
    bias = b_ref[...].astype(jnp.float32)                    # (C_out, 1)

    if use_vpu:
        # Tiny contraction dim: unrolled VPU broadcast-MAC (no MXU drain).
        # TODO(synk): the (C_out,1)x(1,n) broadcasts ride the XLU; stride-0
        #             broadcast loads / SMEM splats of W could move them to the
        #             vld/scalar slots if this ever shows up as XLU-bound.
        wf = w.astype(jnp.float32)
        w_cols = [wf[:, c:c + 1] for c in range(c_in)]       # hoisted (C_out,1) columns

        def mac(xs):                                         # (C_in, n) -> (C_out, n) f32
            acc = w_cols[0] * xs[0:1, :].astype(jnp.float32)
            for c in range(1, c_in):
                acc = acc + w_cols[c] * xs[c:c + 1, :].astype(jnp.float32)
            return acc + bias

        if s_slab >= s_tile:
            # Single chunk per batch row.
            def row_body(bi, carry):
                o_ref[bi] = mac(x_ref[bi]).astype(o_ref.dtype)
                return carry
        else:
            # Chunk the seq dim so the f32 accumulator stays in vregs.
            n_full = s_tile // s_slab
            tail = s_tile - n_full * s_slab

            def row_body(bi, carry):
                def slab_body(si, c):
                    off = pl.multiple_of(si * s_slab, _LANE)
                    xs = x_ref[bi, :, pl.ds(off, s_slab)]
                    o_ref[bi, :, pl.ds(off, s_slab)] = mac(xs).astype(o_ref.dtype)
                    return c

                lax.fori_loop(0, n_full, slab_body, 0, unroll=(n_full <= 8))
                if tail:
                    t0 = n_full * s_slab                      # static offset
                    xs = x_ref[bi, :, pl.ds(t0, tail)]
                    o_ref[bi, :, pl.ds(t0, tail)] = mac(xs).astype(o_ref.dtype)
                return carry

        lax.fori_loop(0, b_tile, row_body, 0, unroll=(b_tile <= 4))
    else:
        # MXU path: per batch row, (C_out, C_in) @ (C_in, s_tile), f32 accumulation.
        def row_body(bi, carry):
            y = jnp.dot(w, x_ref[bi], preferred_element_type=jnp.float32) + bias
            o_ref[bi] = y.astype(o_ref.dtype)
            return carry

        lax.fori_loop(0, b_tile, row_body, 0, unroll=(b_tile <= 4))


def time_distributed_dense1d(x, weight, bias, *,
                             out_dtype=None,
                             vpu_cin_threshold=8,
                             vpu_cout_threshold=32,
                             max_b_tile=None,
                             max_s_tile=None):
    """y[b, :, s] = weight @ x[b, :, s] + bias.

    x: (B, C_in, S); weight: (C_out, C_in); bias: (C_out,).
    Runs in the input dtype (no wrapper-side cast). `out_dtype=jnp.bfloat16`
    halves the dominant output HBM stream if the caller can consume bf16.
    `max_b_tile` / `max_s_tile` are optional tiling caps (testing / tuning).
    """
    B, C_in, S = x.shape
    C_out = weight.shape[0]
    out_dtype = jnp.dtype(x.dtype if out_dtype is None else out_dtype)

    bias2d = bias.astype(jnp.float32).reshape(C_out, 1)

    bytes_per_col = C_in * x.dtype.itemsize + C_out * out_dtype.itemsize

    phys_vmem = _physical_vmem_bytes()
    # ~2/5 of physical VMEM for the double-buffered tiles:
    # ~25 MiB on v7x (64 MiB physical), ~51 MiB on v5e/v6e (128 MiB physical).
    budget = max(8 << 20, (2 * phys_vmem) // 5)

    b_tile, s_tile = _pick_tiles(B, S, bytes_per_col, budget,
                                 max_b_tile=max_b_tile, max_s_tile=max_s_tile)

    use_vpu = (C_in <= vpu_cin_threshold) and (C_out <= vpu_cout_threshold)
    s_slab = _pick_slab(s_tile, C_out) if use_vpu else s_tile

    tile_bytes = 2 * b_tile * s_tile * bytes_per_col
    fixed_bytes = 2 * (C_out * C_in * weight.dtype.itemsize + C_out * 4)
    vmem_limit = int(min(max(phys_vmem - (8 << 20), 16 << 20),
                         max(32 << 20, tile_bytes + fixed_bytes + (8 << 20))))

    kernel = functools.partial(_td_dense_kernel, use_vpu=use_vpu, s_slab=s_slab)

    # TODO(synk): for very large C_in a trailing "arbitrary" K grid axis with an
    #             f32 accumulator scratch (pattern P3) would bound the weight /
    #             x-tile VMEM footprint; unnecessary at typical channel counts.
    return pl.pallas_call(
        kernel,
        out_shape=jax.ShapeDtypeStruct((B, C_out, S), out_dtype),
        grid_spec=pltpu.PrefetchScalarGridSpec(
            num_scalar_prefetch=0,
            grid=(_cdiv(B, b_tile), _cdiv(S, s_tile)),
            in_specs=[
                pl.BlockSpec((b_tile, C_in, s_tile), lambda bi, si: (bi, 0, si)),
                pl.BlockSpec((C_out, C_in), lambda bi, si: (0, 0)),
                pl.BlockSpec((C_out, 1), lambda bi, si: (0, 0)),
            ],
            out_specs=pl.BlockSpec((b_tile, C_out, s_tile),
                                   lambda bi, si: (bi, 0, si)),
        ),
        compiler_params=pltpu.CompilerParams(
            dimension_semantics=("parallel", "parallel"),
            vmem_limit_bytes=vmem_limit,
        ),
    )(x, weight, bias2d)


if __name__ == "__main__":
    def make_case(key, B, C_in, C_out, S):
        kx, kw, kb = jax.random.split(key, 3)
        x = jax.random.normal(kx, (B, C_in, S), dtype=jnp.float32)
        # Deterministic nn.Linear-style init: U(-1/sqrt(in_dim), 1/sqrt(in_dim)).
        bound = 1.0 / float(C_in) ** 0.5
        w = jax.random.uniform(kw, (C_out, C_in), jnp.float32, -bound, bound)
        b = jax.random.uniform(kb, (C_out,), jnp.float32, -bound, bound)
        ref = (jnp.einsum("oc,bcs->bos", w, x,
                          precision=jax.lax.Precision.HIGHEST)
               + b[None, :, None])
        return x, w, b, ref

    # 1) Primary small shape (batch, in_channels, seq) = (2, 4, 16): VPU path.
    x, w, b, ref = make_case(jax.random.PRNGKey(0), 2, 4, 8, 16)
    out = jax.block_until_ready(time_distributed_dense1d(x, w, b))
    assert out.shape == (2, 8, 16) and out.dtype == jnp.float32
    assert jnp.allclose(out, ref, atol=1e-5, rtol=1e-5)

    # 2) Same shape, forced MXU dot path.
    out = jax.block_until_ready(
        time_distributed_dense1d(x, w, b, vpu_cin_threshold=0))
    assert jnp.allclose(out, ref, atol=1e-2, rtol=1e-2)

    # 3) Ragged seq + ragged batch edge blocks and the chunked VPU inner loop
    #    (small tiling caps force a multi-step grid).
    x, w, b, ref = make_case(jax.random.PRNGKey(1), 3, 4, 8, 1200)
    out = jax.block_until_ready(
        time_distributed_dense1d(x, w, b, max_b_tile=2, max_s_tile=1024))
    assert out.shape == (3, 8, 1200)
    assert jnp.allclose(out, ref, atol=1e-5, rtol=1e-5)

    # 4) Larger channel count -> MXU path over a ragged multi-step grid.
    x, w, b, ref = make_case(jax.random.PRNGKey(2), 3, 16, 32, 300)
    out = jax.block_until_ready(
        time_distributed_dense1d(x, w, b, max_b_tile=2, max_s_tile=128))
    assert out.shape == (3, 32, 300)
    assert jnp.allclose(out, ref, atol=1e-2, rtol=1e-2)

    # 5) bf16 output stream (real bandwidth saving lives on the output side).
    out_bf16 = jax.block_until_ready(
        time_distributed_dense1d(x, w, b, out_dtype=jnp.bfloat16))
    assert out_bf16.dtype == jnp.bfloat16
    assert jnp.allclose(out_bf16.astype(jnp.float32), ref, atol=5e-2, rtol=5e-2)

    print("KERNEL_OK")
</pallas_src>

<mosaic_0001>
module attributes {stable_mosaic.version = 11 : i64} {
  func.func @_td_dense_kernel(%arg0: i32, %arg1: i32, %arg2: memref<2x4x16xf32, #tpu.memory_space<vmem>>, %arg3: memref<8x4xf32, #tpu.memory_space<vmem>>, %arg4: memref<8x1xf32, #tpu.memory_space<vmem>>, %arg5: memref<2x8x16xf32, #tpu.memory_space<vmem>>) attributes {dimension_semantics = [#tpu.dimension_semantics<parallel>, #tpu.dimension_semantics<parallel>], iteration_bounds = array<i64: 1, 1>, scalar_prefetch = 0 : i64, scratch_operands = 0 : i64, tpu.core_type = #tpu.core_type<tc>, window_params = [{transform_indices = @transform_0, window_bounds = array<i64: 2, 4, 16>}, {pipeline_mode = #tpu.pipeline_mode<synchronous>, transform_indices = @transform_1, window_bounds = array<i64: 8, 4>}, {pipeline_mode = #tpu.pipeline_mode<synchronous>, transform_indices = @transform_2, window_bounds = array<i64: 8, 1>}, {transform_indices = @transform_3, window_bounds = array<i64: 2, 8, 16>}]} {
    %c0 = arith.constant 0 : index
    %c0_0 = arith.constant 0 : index
    %0 = vector.load %arg3[%c0, %c0_0] : memref<8x4xf32, #tpu.memory_space<vmem>>, vector<8x4xf32>
    %c0_1 = arith.constant 0 : index
    %c0_2 = arith.constant 0 : index
    %1 = vector.load %arg4[%c0_1, %c0_2] : memref<8x1xf32, #tpu.memory_space<vmem>>, vector<8x1xf32>
    %2 = vector.extract_strided_slice %0 {offsets = [0, 0], sizes = [8, 1], strides = [1, 1]} : vector<8x4xf32> to vector<8x1xf32>
    %3 = vector.extract_strided_slice %0 {offsets = [0, 1], sizes = [8, 1], strides = [1, 1]} : vector<8x4xf32> to vector<8x1xf32>
    %4 = vector.extract_strided_slice %0 {offsets = [0, 2], sizes = [8, 1], strides = [1, 1]} : vector<8x4xf32> to vector<8x1xf32>
    %5 = vector.extract_strided_slice %0 {offsets = [0, 3], sizes = [8, 1], strides = [1, 1]} : vector<8x4xf32> to vector<8x1xf32>
    %c0_i32 = arith.constant 0 : i32
    %6 = arith.index_cast %c0_i32 : i32 to index
    %c0_3 = arith.constant 0 : index
    %c0_4 = arith.constant 0 : index
    %7 = vector.load %arg2[%6, %c0_3, %c0_4] : memref<2x4x16xf32, #tpu.memory_space<vmem>>, vector<1x4x16xf32>
    %8 = vector.shape_cast %7 : vector<1x4x16xf32> to vector<4x16xf32>
    %9 = vector.extract_strided_slice %8 {offsets = [0, 0], sizes = [1, 16], strides = [1, 1]} : vector<4x16xf32> to vector<1x16xf32>
    %10 = vector.broadcast %2 : vector<8x1xf32> to vector<8x16xf32>
    %11 = vector.broadcast %9 : vector<1x16xf32> to vector<8x16xf32>
    %12 = arith.mulf %10, %11 : vector<8x16xf32>
    %13 = vector.extract_strided_slice %8 {offsets = [1, 0], sizes = [1, 16], strides = [1, 1]} : vector<4x16xf32> to vector<1x16xf32>
    %14 = vector.broadcast %3 : vector<8x1xf32> to vector<8x16xf32>
    %15 = vector.broadcast %13 : vector<1x16xf32> to vector<8x16xf32>
    %16 = arith.mulf %14, %15 : vector<8x16xf32>
    %17 = arith.addf %12, %16 : vector<8x16xf32>
    %18 = vector.extract_strided_slice %8 {offsets = [2, 0], sizes = [1, 16], strides = [1, 1]} : vector<4x16xf32> to vector<1x16xf32>
    %19 = vector.broadcast %4 : vector<8x1xf32> to vector<8x16xf32>
    %20 = vector.broadcast %18 : vector<1x16xf32> to vector<8x16xf32>
    %21 = arith.mulf %19, %20 : vector<8x16xf32>
    %22 = arith.addf %17, %21 : vector<8x16xf32>
    %23 = vector.extract_strided_slice %8 {offsets = [3, 0], sizes = [1, 16], strides = [1, 1]} : vector<4x16xf32> to vector<1x16xf32>
    %24 = vector.broadcast %5 : vector<8x1xf32> to vector<8x16xf32>
    %25 = vector.broadcast %23 : vector<1x16xf32> to vector<8x16xf32>
    %26 = arith.mulf %24, %25 : vector<8x16xf32>
    %27 = arith.addf %22, %26 : vector<8x16xf32>
    %28 = vector.broadcast %1 : vector<8x1xf32> to vector<8x16xf32>
    %29 = arith.addf %27, %28 : vector<8x16xf32>
    %30 = arith.index_cast %c0_i32 : i32 to index
    %c0_5 = arith.constant 0 : index
    %c0_6 = arith.constant 0 : index
    %31 = vector.load %arg5[%30, %c0_5, %c0_6] : memref<2x8x16xf32, #tpu.memory_space<vmem>>, vector<1x8x16xf32>
    %32 = vector.shape_cast %31 : vector<1x8x16xf32> to vector<8x16xf32>
    %33 = vector.shape_cast %29 : vector<8x16xf32> to vector<1x8x16xf32>
    tpu.vector_store %arg5[%30, %c0_5, %c0_6], %33 {strides = array<i32>} : memref<2x8x16xf32, #tpu.memory_space<vmem>>, vector<1x8x16xf32>,
    %c1_i32 = arith.constant 1 : i32
    %34 = arith.index_cast %c1_i32 : i32 to index
    %c0_7 = arith.constant 0 : index
    %c0_8 = arith.constant 0 : index
    %35 = vector.load %arg2[%34, %c0_7, %c0_8] : memref<2x4x16xf32, #tpu.memory_space<vmem>>, vector<1x4x16xf32>
    %36 = vector.shape_cast %35 : vector<1x4x16xf32> to vector<4x16xf32>
    %37 = vector.extract_strided_slice %36 {offsets = [0, 0], sizes = [1, 16], strides = [1, 1]} : vector<4x16xf32> to vector<1x16xf32>
    %38 = vector.broadcast %2 : vector<8x1xf32> to vector<8x16xf32>
    %39 = vector.broadcast %37 : vector<1x16xf32> to vector<8x16xf32>
    %40 = arith.mulf %38, %39 : vector<8x16xf32>
    %41 = vector.extract_strided_slice %36 {offsets = [1, 0], sizes = [1, 16], strides = [1, 1]} : vector<4x16xf32> to vector<1x16xf32>
    %42 = vector.broadcast %3 : vector<8x1xf32> to vector<8x16xf32>
    %43 = vector.broadcast %41 : vector<1x16xf32> to vector<8x16xf32>
    %44 = arith.mulf %42, %43 : vector<8x16xf32>
    %45 = arith.addf %40, %44 : vector<8x16xf32>
    %46 = vector.extract_strided_slice %36 {offsets = [2, 0], sizes = [1, 16], strides = [1, 1]} : vector<4x16xf32> to vector<1x16xf32>
    %47 = vector.broadcast %4 : vector<8x1xf32> to vector<8x16xf32>
    %48 = vector.broadcast %46 : vector<1x16xf32> to vector<8x16xf32>
    %49 = arith.mulf %47, %48 : vector<8x16xf32>
    %50 = arith.addf %45, %49 : vector<8x16xf32>
    %51 = vector.extract_strided_slice %36 {offsets = [3, 0], sizes = [1, 16], strides = [1, 1]} : vector<4x16xf32> to vector<1x16xf32>
    %52 = vector.broadcast %5 : vector<8x1xf32> to vector<8x16xf32>
    %53 = vector.broadcast %51 : vector<1x16xf32> to vector<8x16xf32>
    %54 = arith.mulf %52, %53 : vector<8x16xf32>
    %55 = arith.addf %50, %54 : vector<8x16xf32>
    %56 = vector.broadcast %1 : vector<8x1xf32> to vector<8x16xf32>
    %57 = arith.addf %55, %56 : vector<8x16xf32>
    %58 = arith.index_cast %c1_i32 : i32 to index
    %c0_9 = arith.constant 0 : index
    %c0_10 = arith.constant 0 : index
    %59 = vector.load %arg5[%58, %c0_9, %c0_10] : memref<2x8x16xf32, #tpu.memory_space<vmem>>, vector<1x8x16xf32>
    %60 = vector.shape_cast %59 : vector<1x8x16xf32> to vector<8x16xf32>
    %61 = vector.shape_cast %57 : vector<8x16xf32> to vector<1x8x16xf32>
    tpu.vector_store %arg5[%58, %c0_9, %c0_10], %61 {strides = array<i32>} : memref<2x8x16xf32, #tpu.memory_space<vmem>>, vector<1x8x16xf32>,
    %c2_i32 = arith.constant 2 : i32
    return
  }
  func.func @transform_0(%arg0: i32, %arg1: i32) -> (i32, i32, i32) {
    %c0_i32 = arith.constant 0 : i32
    %c0_i32_0 = arith.constant 0 : i32
    return %arg0, %c0_i32, %arg1 : i32, i32, i32
  }
  func.func @transform_1(%arg0: i32, %arg1: i32) -> (i32, i32) {
    %c0_i32 = arith.constant 0 : i32
    %c0_i32_0 = arith.constant 0 : i32
    %c0_i32_1 = arith.constant 0 : i32
    return %c0_i32, %c0_i32_0 : i32, i32
  }
  func.func @transform_2(%arg0: i32, %arg1: i32) -> (i32, i32) {
    %c0_i32 = arith.constant 0 : i32
    %c0_i32_0 = arith.constant 0 : i32
    %c0_i32_1 = arith.constant 0 : i32
    return %c0_i32, %c0_i32_0 : i32, i32
  }
  func.func @transform_3(%arg0: i32, %arg1: i32) -> (i32, i32, i32) {
    %c0_i32 = arith.constant 0 : i32
    %c0_i32_0 = arith.constant 0 : i32
    return %arg0, %c0_i32, %arg1 : i32, i32, i32
  }
}

</mosaic_0001>

<llo_original>
// kernel: tpu_custom_call.1
$region0: #{tpu_custom_call.1}
  #allocation0 [shape = 'u32[]', space=smem, size = 0x4, offset = 0x4, fixed_abs, tag = 'smem constant byte address 0x4 - core index']
  #allocation1 [shape = 'u32[72,128]{1,0:T(1,128)}', space=vmem, size = 0x9000, scoped, tag = 'internal scratch']
  %s0 = inlined_call_operand.vmem [shape: f32[2,4,16], index: 0, kind: input, shape index: {}]
  %s1 = inlined_call_operand.vmem [shape: f32[8,4], index: 1, kind: input, shape index: {}]
  %s2 = inlined_call_operand.vmem [shape: f32[8,1], index: 2, kind: input, shape index: {}]
  %s3 = inlined_call_operand.hbm [shape: f32[2,8,16], index: 3, kind: output, shape index: {}]
  %s4 = sld [smem:[#allocation0]]
  $region22: #{tpu_custom_call.1} parent=0
    _
  %s6 = ssub.s32 1, %s4
  %s7 = scalar_select 0, %s6, %s4
  $region1: #{tpu_custom_call.1} parent=0
    #allocation2 [shape = 'u8[8192]{0}', space=vmem, size = 0x2000, scoped, tag = 'output window, operand 0, single buffered']
    #allocation3 [shape = 's32[1]{0}', space=sflag, size = 0x4, scoped, tag = 'scoped memory for tpu_custom_call.1']
    %8 = vsyncpa [#allocation3], 0
    // Predicated region
    $region2: #{tpu_custom_call.1} parent=1 // pred_check
      _
    $region3: #{tpu_custom_call.1} parent=1 // pred_check_branch
      %10 = sbr.rel (0) target = $region5
    $region4: #{tpu_custom_call.1} parent=1 // pred_region
      _
    $region5: #{tpu_custom_call.1} parent=1 // pred_fallthru
      _
    // Predicated region
    $region6: #{tpu_custom_call.1} parent=1 // pred_check
      _
    $region7: #{tpu_custom_call.1} parent=1 // pred_check_branch
      %12 = sbr.rel (0) target = $region9
    $region8: #{tpu_custom_call.1} parent=1 // pred_region
      _
    $region9: #{tpu_custom_call.1} parent=1 // pred_fallthru
      _
    // Predicated region
    $region10: #{tpu_custom_call.1} parent=1 // pred_check
      _
    $region11: #{tpu_custom_call.1} parent=1 // pred_check_branch
      %14 = sbr.rel (0) target = $region13
    $region12: #{tpu_custom_call.1} parent=1 // pred_region
      _
    $region13: #{tpu_custom_call.1} parent=1 // pred_fallthru
      _
    %v15 = vld [vmem:[%s1] sm:$0xff]
    %v16 = vld [vmem:[%s2] sm:$0xff]
    %v17 = vld [vmem:[%s0] sm:$0xf]
    %19 = vset.pattern.permute.xlu0 0
    %20 = vperm.xlu0 %19, %v15
    %v21 = vpop.permute.xlu0 %20
    %v23 = vperm.slane %v17, 0
    %v24 = vmul.f32 %v21, %v23
    %25 = vset.pattern.permute.xlu0 1
    %26 = vperm.xlu0 %25, %v15
    %v27 = vpop.permute.xlu0 %26
    %v29 = vperm.slane %v17, 1
    %v30 = vmul.f32 %v27, %v29
    %v31 = vadd.f32 %v24, %v30
    %32 = vset.pattern.permute.xlu0 2
    %33 = vperm.xlu0 %32, %v15
    %v34 = vpop.permute.xlu0 %33
    %v36 = vperm.slane %v17, 2
    %v37 = vmul.f32 %v34, %v36
    %v38 = vadd.f32 %v31, %v37
    %39 = vset.pattern.permute.xlu0 3
    %40 = vperm.xlu0 %39, %v15
    %v41 = vpop.permute.xlu0 %40
    %v43 = vperm.slane %v17, 3
    %v44 = vmul.f32 %v41, %v43
    %v45 = vadd.f32 %v38, %v44
    %47 = vset.pattern.permute.xlu0 0
    %48 = vperm.xlu0 %47, %v16
    %v49 = vpop.permute.xlu0 %48
    %v51 = vadd.f32 %v45, %v49
    %vm52 = vcmask 130048
    %53 = vst.msk [vmem:[#allocation2] sm:$0xff] %vm52, %v51
    %s54 = scalar_lea.vmem %s0, 4
    %v55 = vld [vmem:[%s54] sm:$0xf]
    %v56 = vperm.slane %v55, 0
    %v57 = vmul.f32 %v21, %v56
    %v58 = vperm.slane %v55, 1
    %v59 = vmul.f32 %v27, %v58
    %v60 = vadd.f32 %v57, %v59
    %v61 = vperm.slane %v55, 2
    %v62 = vmul.f32 %v34, %v61
    %v63 = vadd.f32 %v60, %v62
    %v64 = vperm.slane %v55, 3
    %v65 = vmul.f32 %v41, %v64
    %v66 = vadd.f32 %v63, %v65
    %v67 = vadd.f32 %v66, %v49
    %s68 = scalar_lea.vmem [#allocation2], 8
    %69 = vst.msk [vmem:[%s68] sm:$0xff] %vm52, %v67
    // Predicated region
    $region14: #{tpu_custom_call.1} parent=1 // pred_check
      _
    $region15: #{tpu_custom_call.1} parent=1 // pred_check_branch
      %71 = sbr.rel (0) target = $region17
    $region16: #{tpu_custom_call.1} parent=1 // pred_region
      %73 = vsyncadd [#allocation3], 0
      %s74 = sshll.u32 [#allocation2], 4
      %s75 = int_to_ptr.vmem [resolvable:$true] %s74
      %s76 = sshll.u32 %s3, 4
      %s77 = int_to_ptr.hbm [resolvable:$true] %s76
      %82 = dma.vmem_to_hbm [thread:$0]  %s75, 256, %s77, [#allocation3], 128, 128, 8
    $region17: #{tpu_custom_call.1} parent=1 // pred_fallthru
      _
    // Predicated region
    $region18: #{tpu_custom_call.1} parent=1 // pred_check
      _
    $region19: #{tpu_custom_call.1} parent=1 // pred_check_branch
      %84 = sbr.rel (0) target = $region21
    $region20: #{tpu_custom_call.1} parent=1 // pred_region
      %86 = dma.done [#allocation3], 256
    $region21: #{tpu_custom_call.1} parent=1 // pred_fallthru
      _
    %87 = vsyncpa [#allocation3], 1

</llo_original>
